<compile_context>
chip_gen: v7x
topology: tpu7x:2x2x1
jax: 0.10.0
libtpu: 0.0.40
codegen_flags: <defaults>
</compile_context>

<pallas_src>
import jax
import jax.numpy as jnp
from jax.experimental import pallas as pl
from jax.experimental.pallas import tpu as pltpu


_POOL_MAX_LANES = 4096    # caps the static chunk-unroll inside the pool kernel
_SCALE_MAX_LANES = 32768  # scale kernel has no per-chunk loop; bigger is fine


def _round_up(a, b):
    return (a + b - 1) // b * b


def _vmem_config():
    """(block_budget_bytes, vmem_limit_bytes) per TPU generation."""
    cap = None
    try:
        info = pltpu.get_tpu_info()
        cap = getattr(info, "vmem_capacity_bytes", None)
    except Exception:
        cap = None
    if cap is not None and cap >= 100 * 2**20:   # 128 MiB parts (v5e / v6e)
        return 24 * 2**20, 64 * 2**20
    if cap is not None:                           # 64 MiB parts (v7x-class)
        return 16 * 2**20, 40 * 2**20
    return 12 * 2**20, 32 * 2**20                 # unknown: stay conservative


def _pick_ct(C, cap):
    """Channel tile: full C if it fits, else a multiple-of-8 tile <= cap."""
    if C <= cap:
        return C
    d = (cap // 8) * 8
    while d >= 8:
        if C % d == 0:           # prefer a divisor (no padded channel tail)
            return d
        d -= 8
    return max(8, (cap // 8) * 8)  # padded tail block (valid rows unaffected)


def _select_tiles(B, C, HW, dtype_bytes, *, n_bufs, budget, max_lanes,
                  need_parallel):
    """Choose (Bt, Ct, hw_tile).

    hw_tile is a multiple of 128; Ct is C or a multiple of 8; Bt divides B.
    n_bufs * Bt * Ct * hw_tile * dtype_bytes stays within `budget`.
    When `need_parallel`, guarantee >=2 blocks on a parallel axis whenever the
    shape allows it (Bt <= B//2 for B>=2, else split C) so v7x uses both TCs.
    """
    hw_full = _round_up(max(HW, 1), 128)

    max_ct_budget = max(8, budget // (n_bufs * 128 * dtype_bytes))
    ct_cap = C
    if need_parallel and B < 2 and C >= 16:
        ct_cap = C // 2                      # second parallel axis when B == 1
    ct = _pick_ct(C, min(ct_cap, max_ct_budget))

    lanes = max(128, budget // (n_bufs * ct * dtype_bytes))
    hw_tile = max(128, min(hw_full, min(max_lanes, lanes) // 128 * 128))

    bt_cap = B
    if need_parallel and B >= 2:
        bt_cap = max(1, B // 2)              # keep n_b >= 2 for megacore
    bt = 1
    for cand in range(1, bt_cap + 1):
        if B % cand == 0 and n_bufs * cand * ct * hw_tile * dtype_bytes <= budget:
            bt = cand
    return bt, ct, hw_tile


def _make_pool_kernel(hw_tile, HW, needs_mask):
    n_chunks = hw_tile // 128

    def pool_kernel(x_ref, sum_ref, acc_ref):
        t = pl.program_id(2)
        last = pl.num_programs(2) - 1

        @pl.when(t == 0)
        def _():
            acc_ref[...] = jnp.zeros_like(acc_ref)

        def accumulate(masked):
            def body():
                acc = acc_ref[...]
                for i in range(n_chunks):
                    chunk = x_ref[:, :, i * 128:(i + 1) * 128].astype(jnp.float32)
                    if masked:
                        col = jax.lax.broadcasted_iota(jnp.int32, chunk.shape, 2)
                        valid = (t * hw_tile + i * 128 + col) < HW
                        chunk = jnp.where(valid, chunk, 0.0)
                    acc = acc + chunk          # pure VPU adds, f32 accumulation
                acc_ref[...] = acc
            return body

        if needs_mask:
            # Mask only the tail grid step; every other step is a plain add.
            pl.when(t != last)(accumulate(False))
            pl.when(t == last)(accumulate(True))
        else:
            accumulate(False)()

        @pl.when(t == last)
        def _():
            # Single cross-lane (XLU) reduce per output block.
            sum_ref[...] = jnp.sum(acc_ref[...], axis=2, keepdims=True)

    return pool_kernel


def _scale_kernel(x_ref, attn_ref, o_ref):
    # attn is pre-cast to x.dtype in the wrapper: pure vld-vmul-vst.
    o_ref[...] = x_ref[...] * attn_ref[...]


def channel_attention(x, w1, w2):
    """x: (B, C, H, W); w1: (C//r, C); w2: (C, C//r).  Returns (B, C, H, W)."""
    B, C, H, W = x.shape
    HW = H * W
    dtype_bytes = jnp.dtype(x.dtype).itemsize
    block_budget, vmem_limit = _vmem_config()

    x_flat = x.reshape(B, C, HW)

    # ---- 1) squeeze: HW-tiled global sum ---------------------------------
    p_bt, p_ct, p_hw = _select_tiles(
        B, C, HW, dtype_bytes, n_bufs=2, budget=block_budget,
        max_lanes=_POOL_MAX_LANES, need_parallel=True)
    p_nb, p_nc, p_nhw = B // p_bt, pl.cdiv(C, p_ct), pl.cdiv(HW, p_hw)
    needs_mask = (HW % p_hw) != 0

    sums = pl.pallas_call(
        _make_pool_kernel(p_hw, HW, needs_mask),
        out_shape=jax.ShapeDtypeStruct((B, C, 1), jnp.float32),
        grid_spec=pltpu.PrefetchScalarGridSpec(
            num_scalar_prefetch=0,
            grid=(p_nb, p_nc, p_nhw),
            in_specs=[pl.BlockSpec((p_bt, p_ct, p_hw), lambda b, c, t: (b, c, t))],
            out_specs=pl.BlockSpec((p_bt, p_ct, 1), lambda b, c, t: (b, c, 0)),
            scratch_shapes=[pltpu.VMEM((p_bt, p_ct, 128), jnp.float32)]),
        compiler_params=pltpu.CompilerParams(
            dimension_semantics=("parallel", "parallel", "arbitrary"),
            vmem_limit_bytes=vmem_limit),
    )(x_flat)

    # ---- 2) excitation: tiny (B, C) MLP + sigmoid, off the streaming path -
    means = sums[..., 0] * (1.0 / float(HW))                    # (B, C) f32
    h = jnp.maximum(means @ w1.astype(jnp.float32).T, 0.0)      # (B, C//r)
    e = h @ w2.astype(jnp.float32).T                            # (B, C)
    attn = jax.nn.sigmoid(e)[..., None].astype(x.dtype)         # (B, C, 1)

    # ---- 3) scale: HW-tiled x * attn, all-parallel grid -------------------
    s_bt, s_ct, s_hw = _select_tiles(
        B, C, HW, dtype_bytes, n_bufs=4, budget=block_budget,
        max_lanes=_SCALE_MAX_LANES, need_parallel=False)
    s_nb, s_nc, s_nhw = B // s_bt, pl.cdiv(C, s_ct), pl.cdiv(HW, s_hw)

    # TODO(synk): if the caller can donate x, add input_output_aliases={0: 0}
    # here to reuse x's HBM buffer for the output.
    out_flat = pl.pallas_call(
        _scale_kernel,
        out_shape=jax.ShapeDtypeStruct((B, C, HW), x.dtype),
        grid_spec=pltpu.PrefetchScalarGridSpec(
            num_scalar_prefetch=0,
            grid=(s_nb, s_nc, s_nhw),
            in_specs=[
                pl.BlockSpec((s_bt, s_ct, s_hw), lambda b, c, t: (b, c, t)),
                pl.BlockSpec((s_bt, s_ct, 1), lambda b, c, t: (b, c, 0)),
            ],
            out_specs=pl.BlockSpec((s_bt, s_ct, s_hw), lambda b, c, t: (b, c, t)),
        ),
        compiler_params=pltpu.CompilerParams(
            dimension_semantics=("parallel", "parallel", "parallel"),
            vmem_limit_bytes=vmem_limit),
    )(x_flat, attn)

    return out_flat.reshape(B, C, H, W)


def _reference(x, w1, w2):
    B, C, H, W = x.shape
    sq = x.reshape(B, C, -1).mean(axis=2)                       # (B, C)
    e = jnp.maximum(sq @ w1.T, 0.0)                             # (B, C//r)
    e = e @ w2.T                                                # (B, C)
    attn = jax.nn.sigmoid(e).reshape(B, C, 1, 1)
    return x * attn


if __name__ == "__main__":
    key = jax.random.PRNGKey(0)
    fn = jax.jit(channel_attention)

    def run_case(B, C, H, W, reduction):
        hid = max(1, C // reduction)
        kx, k1, k2 = jax.random.split(jax.random.fold_in(key, B * 1000 + H * W), 3)
        x = jax.random.normal(kx, (B, C, H, W), dtype=jnp.float32)
        # nn.Linear(C, C//r, bias=False).weight has shape (C//r, C)
        w1 = jax.random.normal(k1, (hid, C), dtype=jnp.float32) * (1.0 / jnp.sqrt(C))
        # nn.Linear(C//r, C, bias=False).weight has shape (C, C//r)
        w2 = jax.random.normal(k2, (C, hid), dtype=jnp.float32) * (1.0 / jnp.sqrt(hid))
        out = jax.block_until_ready(fn(x, w1, w2))
        ref = _reference(x, w1, w2)
        assert out.shape == (B, C, H, W)
        assert jnp.allclose(out, ref, atol=1e-5, rtol=1e-5), (B, C, H, W)

    # Evenly-tiled path (HW multiple of 128, B >= 2 -> batch-parallel pool).
    run_case(2, 32, 16, 16, 16)
    # Tail-masked path (HW=63 not lane-aligned) + B==1 channel-split parallelism.
    run_case(1, 32, 7, 9, 16)

    print("KERNEL_OK")
</pallas_src>

<mosaic_0001>
module attributes {stable_mosaic.version = 11 : i64} {
  func.func @pool_kernel(%arg0: i32, %arg1: i32, %arg2: i32, %arg3: memref<1x32x256xf32, #tpu.memory_space<vmem>>, %arg4: memref<1x32x1xf32, #tpu.memory_space<vmem>>, %arg5: memref<1x32x128xf32, #tpu.memory_space<vmem>>) attributes {dimension_semantics = [#tpu.dimension_semantics<parallel>, #tpu.dimension_semantics<parallel>, #tpu.dimension_semantics<arbitrary>], iteration_bounds = array<i64: 2, 1, 1>, scalar_prefetch = 0 : i64, scratch_operands = 1 : i64, tpu.core_type = #tpu.core_type<tc>, window_params = [{transform_indices = @transform_0, window_bounds = array<i64: 1, 32, 256>}, {transform_indices = @transform_1, window_bounds = array<i64: 1, 32, 1>}]} {
    %c0_i32 = arith.constant 0 : i32
    %0 = arith.cmpi eq, %arg2, %c0_i32 : i32
    %1 = arith.extui %0 : i1 to i32
    %c0_i32_0 = arith.constant 0 : i32
    %2 = arith.cmpi ne, %1, %c0_i32_0 : i32
    scf.if %2 {
      %cst = arith.constant 0.000000e+00 : f32
      %12 = vector.broadcast %cst : f32 to vector<1x32x128xf32>
      %c0_13 = arith.constant 0 : index
      %c0_14 = arith.constant 0 : index
      %c0_15 = arith.constant 0 : index
      %13 = vector.load %arg5[%c0_13, %c0_14, %c0_15] : memref<1x32x128xf32, #tpu.memory_space<vmem>>, vector<1x32x128xf32>
      tpu.vector_store %arg5[%c0_13, %c0_14, %c0_15], %12 {strides = array<i32>} : memref<1x32x128xf32, #tpu.memory_space<vmem>>, vector<1x32x128xf32>,
    } else {
    }
    %c0 = arith.constant 0 : index
    %c0_1 = arith.constant 0 : index
    %c0_2 = arith.constant 0 : index
    %3 = vector.load %arg5[%c0, %c0_1, %c0_2] : memref<1x32x128xf32, #tpu.memory_space<vmem>>, vector<1x32x128xf32>
    %c0_3 = arith.constant 0 : index
    %c0_4 = arith.constant 0 : index
    %c0_5 = arith.constant 0 : index
    %4 = vector.load %arg3[%c0_3, %c0_4, %c0_5] : memref<1x32x256xf32, #tpu.memory_space<vmem>>, vector<1x32x128xf32>
    %5 = arith.addf %3, %4 : vector<1x32x128xf32>
    %c0_6 = arith.constant 0 : index
    %c0_7 = arith.constant 0 : index
    %c128 = arith.constant 128 : index
    %6 = vector.load %arg3[%c0_6, %c0_7, %c128] : memref<1x32x256xf32, #tpu.memory_space<vmem>>, vector<1x32x128xf32>
    %7 = arith.addf %5, %6 : vector<1x32x128xf32>
    %c0_8 = arith.constant 0 : index
    %c0_9 = arith.constant 0 : index
    %c0_10 = arith.constant 0 : index
    %8 = vector.load %arg5[%c0_8, %c0_9, %c0_10] : memref<1x32x128xf32, #tpu.memory_space<vmem>>, vector<1x32x128xf32>
    tpu.vector_store %arg5[%c0_8, %c0_9, %c0_10], %7 {strides = array<i32>} : memref<1x32x128xf32, #tpu.memory_space<vmem>>, vector<1x32x128xf32>,
    %c0_i32_11 = arith.constant 0 : i32
    %9 = arith.cmpi eq, %arg2, %c0_i32_11 : i32
    %10 = arith.extui %9 : i1 to i32
    %c0_i32_12 = arith.constant 0 : i32
    %11 = arith.cmpi ne, %10, %c0_i32_12 : i32
    scf.if %11 {
      %c0_13 = arith.constant 0 : index
      %c0_14 = arith.constant 0 : index
      %c0_15 = arith.constant 0 : index
      %12 = vector.load %arg5[%c0_13, %c0_14, %c0_15] : memref<1x32x128xf32, #tpu.memory_space<vmem>>, vector<1x32x128xf32>
      %cst = arith.constant dense<0.000000e+00> : vector<1x32xf32>
      %13 = vector.multi_reduction <add>, %12, %cst [2] : vector<1x32x128xf32> to vector<1x32xf32>
      %14 = vector.shape_cast %13 : vector<1x32xf32> to vector<1x32x1xf32>
      %c0_16 = arith.constant 0 : index
      %c0_17 = arith.constant 0 : index
      %c0_18 = arith.constant 0 : index
      %15 = vector.load %arg4[%c0_16, %c0_17, %c0_18] : memref<1x32x1xf32, #tpu.memory_space<vmem>>, vector<1x32x1xf32>
      tpu.vector_store %arg4[%c0_16, %c0_17, %c0_18], %14 {strides = array<i32>} : memref<1x32x1xf32, #tpu.memory_space<vmem>>, vector<1x32x1xf32>,
    } else {
    }
    return
  }
  func.func @transform_0(%arg0: i32, %arg1: i32, %arg2: i32) -> (i32, i32, i32) {
    %c0_i32 = arith.constant 0 : i32
    return %arg0, %arg1, %arg2 : i32, i32, i32
  }
  func.func @transform_1(%arg0: i32, %arg1: i32, %arg2: i32) -> (i32, i32, i32) {
    %c0_i32 = arith.constant 0 : i32
    %c0_i32_0 = arith.constant 0 : i32
    return %arg0, %arg1, %c0_i32 : i32, i32, i32
  }
}

module attributes {stable_mosaic.version = 11 : i64} {
  func.func @_scale_kernel(%arg0: i32, %arg1: i32, %arg2: i32, %arg3: memref<2x32x256xf32, #tpu.memory_space<vmem>>, %arg4: memref<2x32x1xf32, #tpu.memory_space<vmem>>, %arg5: memref<2x32x256xf32, #tpu.memory_space<vmem>>) attributes {dimension_semantics = [#tpu.dimension_semantics<parallel>, #tpu.dimension_semantics<parallel>, #tpu.dimension_semantics<parallel>], iteration_bounds = array<i64: 1, 1, 1>, scalar_prefetch = 0 : i64, scratch_operands = 0 : i64, tpu.core_type = #tpu.core_type<tc>, window_params = [{transform_indices = @transform_0, window_bounds = array<i64: 2, 32, 256>}, {transform_indices = @transform_1, window_bounds = array<i64: 2, 32, 1>}, {transform_indices = @transform_2, window_bounds = array<i64: 2, 32, 256>}]} {
    %c0 = arith.constant 0 : index
    %c0_0 = arith.constant 0 : index
    %c0_1 = arith.constant 0 : index
    %0 = vector.load %arg3[%c0, %c0_0, %c0_1] : memref<2x32x256xf32, #tpu.memory_space<vmem>>, vector<2x32x256xf32>
    %c0_2 = arith.constant 0 : index
    %c0_3 = arith.constant 0 : index
    %c0_4 = arith.constant 0 : index
    %1 = vector.load %arg4[%c0_2, %c0_3, %c0_4] : memref<2x32x1xf32, #tpu.memory_space<vmem>>, vector<2x32x1xf32>
    %2 = vector.broadcast %1 : vector<2x32x1xf32> to vector<2x32x256xf32>
    %3 = arith.mulf %0, %2 : vector<2x32x256xf32>
    %c0_5 = arith.constant 0 : index
    %c0_6 = arith.constant 0 : index
    %c0_7 = arith.constant 0 : index
    %4 = vector.load %arg5[%c0_5, %c0_6, %c0_7] : memref<2x32x256xf32, #tpu.memory_space<vmem>>, vector<2x32x256xf32>
    tpu.vector_store %arg5[%c0_5, %c0_6, %c0_7], %3 {strides = array<i32>} : memref<2x32x256xf32, #tpu.memory_space<vmem>>, vector<2x32x256xf32>,
    return
  }
  func.func @transform_0(%arg0: i32, %arg1: i32, %arg2: i32) -> (i32, i32, i32) {
    %c0_i32 = arith.constant 0 : i32
    return %arg0, %arg1, %arg2 : i32, i32, i32
  }
  func.func @transform_1(%arg0: i32, %arg1: i32, %arg2: i32) -> (i32, i32, i32) {
    %c0_i32 = arith.constant 0 : i32
    %c0_i32_0 = arith.constant 0 : i32
    return %arg0, %arg1, %c0_i32 : i32, i32, i32
  }
  func.func @transform_2(%arg0: i32, %arg1: i32, %arg2: i32) -> (i32, i32, i32) {
    %c0_i32 = arith.constant 0 : i32
    return %arg0, %arg1, %arg2 : i32, i32, i32
  }
}

</mosaic_0001>

<llo_original>
// kernel: channel_attention.2
$region0: #{channel_attention.2}
  #allocation0 [shape = 'u32[]', space=smem, size = 0x4, offset = 0x4, fixed_abs, tag = 'smem constant byte address 0x4 - core index']
  #allocation1 [shape = 'u32[144,128]{1,0:T(1,128)}', space=vmem, size = 0x12000, scoped, tag = 'internal scratch']
  #allocation2 [shape = 'f32[1,32,128]{2,1,0:T(8,128)}', space=vmem, size = 0x4000, scoped, tag = 'scratch operand']
  %s0 = inlined_call_operand.vmem [shape: f32[2,32,256], index: 0, kind: input, shape index: {}]
  %s1 = inlined_call_operand.vmem [shape: f32[2,32,1], index: 1, kind: output, shape index: {}]
  %s2 = sld [smem:[#allocation0]]
  $region45: #{channel_attention.2} parent=0
    _
  %s4 = ssub.s32 1, %s2
  %s5 = scalar_select 0, %s4, %s2
  loop: start=0, step=1, limit=4
  $region2: #{channel_attention.2} parent=0 // loop_pre_header
    _
  $region3: #{channel_attention.2} parent=0 // loop_header
    %s7 = sphi 0, %s11
    %p8 = scmp.ge.s32.totalorder %s7, 4
    %s14 = sphi 0, %s33
    %s15 = sphi 0, %s29
    %s16 = sphi 0, %s25
    %s17 = sphi 0, %s14
    %s18 = sphi 0, %s15
    %s19 = sphi 0, %s16
    %s20 = sphi 0, %s17
    %s21 = sphi 0, %s18
    %s22 = sphi 0, %s19
    %s40 = sphi 0, %s42
    %s43 = sphi 0, %s40
    %s44 = sphi 0, %s43
    %s60 = sphi 0, %s44
    %s68 = sphi 0, %s70
    %s71 = sphi 0, %s68
    %s72 = sphi 0, %s71
    %s88 = sphi 0, %s72
  $region4: #{channel_attention.2} parent=0 // loop_header_branch
    %10 = sbr.rel (%p8) target = $region8
  $region5: #{channel_attention.2} parent=0 // loop_body
    %s12 = ssub.s32 %s7, 1
    %s13 = ssub.s32 %s7, 2
    %s23 = sadd.s32 1, %s16
    %p24 = scmp.ge.s32.totalorder %s23, 1
    %s25 = scalar_select %p24, 0, %s23
    %s26 = sadd.s32 1, %s15
    %s27 = scalar_select %p24, %s26, %s15
    %p28 = scmp.ge.s32.totalorder %s27, 1
    %s29 = scalar_select %p28, 0, %s27
    %s30 = sadd.s32 1, %s14
    %s31 = scalar_select %p28, %s30, %s14
    %p32 = scmp.ge.s32.totalorder %s31, 2
    %s33 = scalar_select %p32, 0, %s31
    %s34 = ssub.s32 %s14, %s33
    %s35 = ssub.s32 %s15, %s29
    %s36 = sor.u32 %s34, %s35
    %s37 = ssub.s32 %s16, %s25
    %s38 = sor.u32 %s36, %s37
    %p39 = scmp.eq.s32.totalorder %s38, 0
    %s41 = sadd.s32 %s40, 1
    %s42 = scalar_select %p39, %s40, %s41
    %p45 = pneg %p39
    %p46 = scmp.eq.s32.totalorder %s7, 1
    %p47 = por %p45, %p46
    %p48 = scmp.ne.s32.totalorder %s40, %s43
    %p49 = scmp.eq.s32.totalorder %s7, 0
    %p50 = por %p48, %p49
    %p51 = scmp.ne.s32.totalorder %s40, %s43
    %p52 = scmp.eq.s32.totalorder %s12, 1
    %p53 = por %p51, %p52
    %p54 = scmp.ne.s32.totalorder %s43, %s44
    %p55 = scmp.eq.s32.totalorder %s12, 0
    %p56 = por %p54, %p55
    %p57 = scmp.ne.s32.totalorder %s43, %s44
    %p58 = scmp.eq.s32.totalorder %s13, 1
    %p59 = por %p57, %p58
    %p61 = scmp.ne.s32.totalorder %s44, %s60
    %p62 = scmp.eq.s32.totalorder %s13, 0
    %p63 = por %p61, %p62
    %s64 = ssub.s32 %s14, %s33
    %s65 = ssub.s32 %s15, %s29
    %s66 = sor.u32 %s64, %s65
    %p67 = scmp.eq.s32.totalorder %s66, 0
    %s69 = sadd.s32 %s68, 1
    %s70 = scalar_select %p67, %s68, %s69
    %p73 = pneg %p67
    %p74 = scmp.eq.s32.totalorder %s7, 1
    %p75 = por %p73, %p74
    %p76 = scmp.ne.s32.totalorder %s68, %s71
    %p77 = scmp.eq.s32.totalorder %s7, 0
    %p78 = por %p76, %p77
    %p79 = scmp.ne.s32.totalorder %s68, %s71
    %p80 = scmp.eq.s32.totalorder %s12, 1
    %p81 = por %p79, %p80
    %p82 = scmp.ne.s32.totalorder %s71, %s72
    %p83 = scmp.eq.s32.totalorder %s12, 0
    %p84 = por %p82, %p83
    %p85 = scmp.ne.s32.totalorder %s71, %s72
    %p86 = scmp.eq.s32.totalorder %s13, 1
    %p87 = por %p85, %p86
    %p89 = scmp.ne.s32.totalorder %s72, %s88
    %p90 = scmp.eq.s32.totalorder %s13, 0
    %p91 = por %p89, %p90
    %p92 = scmp.le.s32.totalorder 1, %s7
    %p93 = scmp.lt.s32.totalorder %s7, 3
    %p94 = pnand %p92, %p93
    %p95 = pneg %p94
    // Predicated region
    $region9: #{channel_attention.2} parent=5 // pred_check
      _
    $region10: #{channel_attention.2} parent=5 // pred_check_branch
      %97 = sbr.rel (%p94) target = $region12
    $region11: #{channel_attention.2} parent=5 // pred_region
      %s98 = ssub.s32 %s7, 1
    $region12: #{channel_attention.2} parent=5 // pred_fallthru
      _
    %p99 = scmp.lt.s32.totalorder %s7, 2
    // Predicated region
    $region13: #{channel_attention.2} parent=5 // pred_check
      %p100 = pneg %p99
    $region14: #{channel_attention.2} parent=5 // pred_check_branch
      %102 = sbr.rel (%p100) target = $region16
    $region15: #{channel_attention.2} parent=5 // pred_region
      // Predicated region
      $region17: #{channel_attention.2} parent=15 // pred_check
        %p103 = pneg %p50
      $region18: #{channel_attention.2} parent=15 // pred_check_branch
        %105 = sbr.rel (%p103) target = $region20
      $region19: #{channel_attention.2} parent=15 // pred_region
        %s106 = smul.u32 4, %s15
        %s107 = smul.u32 2, %s16
        %p108 = scmp.lt.s32.totalorder %s14, 1
        %s109 = scalar_select %p108, %s14, 1
        %p110 = scmp.lt.s32.totalorder %s106, 3
        %s111 = scalar_select %p110, %s106, 3
        %p112 = scmp.lt.s32.totalorder %s107, 1
        %s113 = scalar_select %p112, %s107, 1
        %s114 = smul.addr %s111, 2
        %s115 = sadd.s32 %s113, %s114
        %s116 = smul.addr %s109, 8
        %s117 = sadd.s32 %s115, %s116
        %s118 = smul.addr %s117, 8
        %s119 = scalar_lea.vmem %s0, %s118
        %s120 = smul.u32 4, %s15
        %s121 = smul.u32 2, %s16
      $region20: #{channel_attention.2} parent=15 // pred_fallthru
        _
    $region16: #{channel_attention.2} parent=5 // pred_fallthru
      _
    %p122 = scmp.le.s32.totalorder 1, %s7
    %p123 = scmp.lt.s32.totalorder %s7, 3
    %p124 = pnand %p122, %p123
    %p125 = pneg %p124
    // Predicated region
    $region21: #{channel_attention.2} parent=5 // pred_check
      _
    $region22: #{channel_attention.2} parent=5 // pred_check_branch
      %127 = sbr.rel (%p124) target = $region24
    $region23: #{channel_attention.2} parent=5 // pred_region
      %s128 = ssub.s32 %s7, 1
      %s129 = smul.u32 4, %s18
      %s130 = smul.u32 2, %s19
      %p131 = scmp.lt.s32.totalorder %s17, 1
      %s132 = scalar_select %p131, %s17, 1
      %p133 = scmp.lt.s32.totalorder %s129, 3
      %s134 = scalar_select %p133, %s129, 3
      %p135 = scmp.lt.s32.totalorder %s130, 1
      %s136 = scalar_select %p135, %s130, 1
      %s137 = smul.addr %s134, 2
      %s138 = sadd.s32 %s136, %s137
      %s139 = smul.addr %s132, 8
      %s140 = sadd.s32 %s138, %s139
      %s141 = smul.addr %s140, 8
      %s142 = scalar_lea.vmem %s0, %s141
      %p143 = pneg %p56
      %p144 = pneg %p53
      %p145 = pneg %p84
      %p146 = pneg %p81
      %s147 = smul.u32 4, %s18
      %p148 = scmp.lt.s32.totalorder %s17, 1
      %s149 = scalar_select %p148, %s17, 1
      %p150 = scmp.lt.s32.totalorder %s147, 3
      %s151 = scalar_select %p150, %s147, 3
      %s152 = smul.addr %s149, 4
      %s153 = sadd.s32 %s151, %s152
      %s154 = smul.addr %s153, 8
      %s155 = scalar_lea.vmem %s1, %s154
      %s156 = smul.u32 4, %s18
      %s157 = smul.u32 2, %s19
      %p158 = scmp.lt.s32.totalorder %s17, 1
      %s159 = scalar_select %p158, %s17, 1
      %p160 = scmp.lt.s32.totalorder %s156, 3
      %s161 = scalar_select %p160, %s156, 3
      %p162 = scmp.lt.s32.totalorder %s157, 1
      %s163 = scalar_select %p162, %s157, 1
      %s164 = smul.addr %s161, 2
      %s165 = sadd.s32 %s163, %s164
      %s166 = smul.addr %s159, 8
      %s167 = sadd.s32 %s165, %s166
      %s168 = smul.addr %s167, 8
      %s169 = scalar_lea.vmem %s0, %s168
      %s170 = smul.u32 4, %s18
      %s171 = smul.u32 2, %s19
      %s172 = smul.u32 4, %s18
      %p173 = scmp.lt.s32.totalorder %s17, 1
      %s174 = scalar_select %p173, %s17, 1
      %p175 = scmp.lt.s32.totalorder %s172, 3
      %s176 = scalar_select %p175, %s172, 3
      %s177 = smul.addr %s174, 4
      %s178 = sadd.s32 %s176, %s177
      %s179 = smul.addr %s178, 8
      %s180 = scalar_lea.vmem %s1, %s179
      %s181 = smul.u32 4, %s18
      %p182 = scmp.eq.s32.totalorder %s19, 0
      // Predicated region
      $region25: #{channel_attention.2} parent=23 // pred_check
        %p183 = pneg %p182
      $region26: #{channel_attention.2} parent=23 // pred_check_branch
        %185 = sbr.rel (%p183) target = $region28
      $region27: #{channel_attention.2} parent=23 // pred_region
        %186 = vst [vmem:[#allocation2] sm:$0xff] 0.0
        %187 = vst [vmem:[#allocation2 + $0x8] sm:$0xff] 0.0
        %188 = vst [vmem:[#allocation2 + $0x10] sm:$0xff] 0.0
        %189 = vst [vmem:[#allocation2 + $0x18] sm:$0xff] 0.0
      $region28: #{channel_attention.2} parent=23 // pred_fallthru
        _
      %v190 = vld [vmem:[#allocation2] sm:$0xff]
      %v191 = vld [vmem:[#allocation2 + $0x8] sm:$0xff]
      %v192 = vld [vmem:[#allocation2 + $0x10] sm:$0xff]
      %v193 = vld [vmem:[#allocation2 + $0x18] sm:$0xff]
      %v194 = vld [vmem:[%s169] sm:$0xff]
      %v195 = vld [vmem:[%s169 + $0x10] sm:$0xff]
      %v196 = vld [vmem:[%s169 + $0x20] sm:$0xff]
      %v197 = vld [vmem:[%s169 + $0x30] sm:$0xff]
      %v198 = vadd.f32 %v190, %v194
      %v199 = vadd.f32 %v191, %v195
      %v200 = vadd.f32 %v192, %v196
      %v201 = vadd.f32 %v193, %v197
      %v202 = vld [vmem:[%s169 + $0x8] sm:$0xff]
      %v203 = vld [vmem:[%s169 + $0x18] sm:$0xff]
      %v204 = vld [vmem:[%s169 + $0x28] sm:$0xff]
      %v205 = vld [vmem:[%s169 + $0x38] sm:$0xff]
      %v206 = vadd.f32 %v198, %v202
      %v207 = vadd.f32 %v199, %v203
      %v208 = vadd.f32 %v200, %v204
      %v209 = vadd.f32 %v201, %v205
      %210 = vst [vmem:[#allocation2] sm:$0xff] %v206
      %211 = vst [vmem:[#allocation2 + $0x8] sm:$0xff] %v207
      %212 = vst [vmem:[#allocation2 + $0x10] sm:$0xff] %v208
      %213 = vst [vmem:[#allocation2 + $0x18] sm:$0xff] %v209
      // Predicated region
      $region29: #{channel_attention.2} parent=23 // pred_check
        %p214 = pneg %p182
      $region30: #{channel_attention.2} parent=23 // pred_check_branch
        %216 = sbr.rel (%p214) target = $region32
      $region31: #{channel_attention.2} parent=23 // pred_region
        %v217 = vld [vmem:[#allocation2] sm:$0xff]
        %v218 = vld [vmem:[#allocation2 + $0x8] sm:$0xff]
        %v219 = vld [vmem:[#allocation2 + $0x10] sm:$0xff]
        %v220 = vld [vmem:[#allocation2 + $0x18] sm:$0xff]
        %221 = vadd.xlane.f32.xlu0 %v217
        %v222 = vpop.xlane.xlu0 %221
        %223 = vadd.xlane.f32.xlu0 %v218
        %v224 = vpop.xlane.xlu0 %223
        %225 = vadd.xlane.f32.xlu0 %v219
        %v226 = vpop.xlane.xlu0 %225
        %227 = vadd.xlane.f32.xlu0 %v220
        %v228 = vpop.xlane.xlu0 %227
        %vm229 = vcmask 7168
        %230 = vst.msk [vmem:[%s180] sm:$0xff] %vm229, %v222
        %231 = vst.msk [vmem:[%s180 + $0x8] sm:$0xff] %vm229, %v224
        %232 = vst.msk [vmem:[%s180 + $0x10] sm:$0xff] %vm229, %v226
        %233 = vst.msk [vmem:[%s180 + $0x18] sm:$0xff] %vm229, %v228
      $region32: #{channel_attention.2} parent=23 // pred_fallthru
        _
      %s234 = smul.u32 4, %s18
      %p235 = scmp.lt.s32.totalorder %s17, 1
      %s236 = scalar_select %p235, %s17, 1
      %p237 = scmp.lt.s32.totalorder %s234, 3
      %s238 = scalar_select %p237, %s234, 3
      %s239 = smul.addr %s236, 4
      %s240 = sadd.s32 %s238, %s239
      %s241 = smul.addr %s240, 8
      %s242 = scalar_lea.vmem %s1, %s241
      // Predicated region
      $region33: #{channel_attention.2} parent=23 // pred_check
        %p243 = pneg %p81
      $region34: #{channel_attention.2} parent=23 // pred_check_branch
        %245 = sbr.rel (%p243) target = $region36
      $region35: #{channel_attention.2} parent=23 // pred_region
        %s246 = smul.u32 4, %s18
      $region36: #{channel_attention.2} parent=23 // pred_fallthru
        _
    $region24: #{channel_attention.2} parent=5 // pred_fallthru
      _
    %p247 = scmp.le.s32.totalorder 2, %s7
    // Predicated region
    $region37: #{channel_attention.2} parent=5 // pred_check
      %p248 = pneg %p247
    $region38: #{channel_attention.2} parent=5 // pred_check_branch
      %250 = sbr.rel (%p248) target = $region40
    $region39: #{channel_attention.2} parent=5 // pred_region
      %s251 = ssub.s32 %s7, 2
      // Predicated region
      $region41: #{channel_attention.2} parent=39 // pred_check
        %p252 = pneg %p87
      $region42: #{channel_attention.2} parent=39 // pred_check_branch
        %254 = sbr.rel (%p252) target = $region44
      $region43: #{channel_attention.2} parent=39 // pred_region
        %s255 = smul.u32 4, %s21
        %p256 = scmp.lt.s32.totalorder %s20, 1
        %s257 = scalar_select %p256, %s20, 1
        %p258 = scmp.lt.s32.totalorder %s255, 3
        %s259 = scalar_select %p258, %s255, 3
        %s260 = smul.addr %s257, 4
        %s261 = sadd.s32 %s259, %s260
        %s262 = smul.addr %s261, 8
        %s263 = scalar_lea.vmem %s1, %s262
      $region44: #{channel_attention.2} parent=39 // pred_fallthru
        _
    $region40: #{channel_attention.2} parent=5 // pred_fallthru
      _
  $region6: #{channel_attention.2} parent=0 // loop_footer
    %s11 = sadd.s32 1, %s7
  $region7: #{channel_attention.2} parent=0 // loop_footer_branch
    %6 = sbr.rel target = $region3
  $region8: #{channel_attention.2} parent=0 // loop_exit
    _

// kernel: channel_attention.3
$region0: #{channel_attention.3}
  #allocation0 [shape = 'u32[]', space=smem, size = 0x4, offset = 0x4, fixed_abs, tag = 'smem constant byte address 0x4 - core index']
  #allocation1 [shape = 'u32[144,128]{1,0:T(1,128)}', space=vmem, size = 0x12000, scoped, tag = 'internal scratch']
  %s0 = inlined_call_operand.vmem [shape: f32[2,32,256], index: 0, kind: input, shape index: {}]
  %s1 = inlined_call_operand.vmem [shape: f32[2,32,1], index: 1, kind: input, shape index: {}]
  %s2 = inlined_call_operand.vmem [shape: f32[2,32,256], index: 2, kind: output, shape index: {}]
  %s3 = sld [smem:[#allocation0]]
  $region18: #{channel_attention.3} parent=0
    _
  %s5 = ssub.s32 1, %s3
  %s6 = scalar_select 0, %s5, %s3
  // Predicated region
  $region2: #{channel_attention.3} parent=0 // pred_check
    _
  $region3: #{channel_attention.3} parent=0 // pred_check_branch
    %8 = sbr.rel (0) target = $region5
  $region4: #{channel_attention.3} parent=0 // pred_region
    _
  $region5: #{channel_attention.3} parent=0 // pred_fallthru
    _
  // Predicated region
  $region6: #{channel_attention.3} parent=0 // pred_check
    _
  $region7: #{channel_attention.3} parent=0 // pred_check_branch
    %10 = sbr.rel (0) target = $region9
  $region8: #{channel_attention.3} parent=0 // pred_region
    _
  $region9: #{channel_attention.3} parent=0 // pred_fallthru
    _
  %v11 = vld [vmem:[%s0] sm:$0xff]
  %v12 = vld [vmem:[%s0 + $0x8] sm:$0xff]
  %v13 = vld [vmem:[%s0 + $0x10] sm:$0xff]
  %v14 = vld [vmem:[%s0 + $0x18] sm:$0xff]
  %v15 = vld [vmem:[%s0 + $0x20] sm:$0xff]
  %v16 = vld [vmem:[%s0 + $0x28] sm:$0xff]
  %v17 = vld [vmem:[%s0 + $0x30] sm:$0xff]
  %v18 = vld [vmem:[%s0 + $0x38] sm:$0xff]
  %v19 = vld [vmem:[%s0 + $0x40] sm:$0xff]
  %v20 = vld [vmem:[%s0 + $0x48] sm:$0xff]
  %v21 = vld [vmem:[%s0 + $0x50] sm:$0xff]
  %v22 = vld [vmem:[%s0 + $0x58] sm:$0xff]
  %v23 = vld [vmem:[%s0 + $0x60] sm:$0xff]
  %v24 = vld [vmem:[%s0 + $0x68] sm:$0xff]
  %v25 = vld [vmem:[%s0 + $0x70] sm:$0xff]
  %v26 = vld [vmem:[%s0 + $0x78] sm:$0xff]
  %v27 = vld [vmem:[%s1] sm:$0xff]
  %v28 = vld [vmem:[%s1 + $0x8] sm:$0xff]
  %v29 = vld [vmem:[%s1 + $0x10] sm:$0xff]
  %v30 = vld [vmem:[%s1 + $0x18] sm:$0xff]
  %v31 = vld [vmem:[%s1 + $0x20] sm:$0xff]
  %v32 = vld [vmem:[%s1 + $0x28] sm:$0xff]
  %v33 = vld [vmem:[%s1 + $0x30] sm:$0xff]
  %v34 = vld [vmem:[%s1 + $0x38] sm:$0xff]
  %36 = vset.pattern.permute.xlu0 0
  %37 = vperm.xlu0 %36, %v27
  %v38 = vpop.permute.xlu0 %37
  %41 = vset.pattern.permute.xlu0 0
  %42 = vperm.xlu0 %41, %v28
  %v43 = vpop.permute.xlu0 %42
  %46 = vset.pattern.permute.xlu0 0
  %47 = vperm.xlu0 %46, %v29
  %v48 = vpop.permute.xlu0 %47
  %51 = vset.pattern.permute.xlu0 0
  %52 = vperm.xlu0 %51, %v30
  %v53 = vpop.permute.xlu0 %52
  %56 = vset.pattern.permute.xlu0 0
  %57 = vperm.xlu0 %56, %v31
  %v58 = vpop.permute.xlu0 %57
  %61 = vset.pattern.permute.xlu0 0
  %62 = vperm.xlu0 %61, %v32
  %v63 = vpop.permute.xlu0 %62
  %66 = vset.pattern.permute.xlu0 0
  %67 = vperm.xlu0 %66, %v33
  %v68 = vpop.permute.xlu0 %67
  %71 = vset.pattern.permute.xlu0 0
  %72 = vperm.xlu0 %71, %v34
  %v73 = vpop.permute.xlu0 %72
  %v75 = vmul.f32 %v11, %v38
  %v76 = vmul.f32 %v12, %v38
  %v77 = vmul.f32 %v13, %v43
  %v78 = vmul.f32 %v14, %v43
  %v79 = vmul.f32 %v15, %v48
  %v80 = vmul.f32 %v16, %v48
  %v81 = vmul.f32 %v17, %v53
  %v82 = vmul.f32 %v18, %v53
  %v83 = vmul.f32 %v19, %v58
  %v84 = vmul.f32 %v20, %v58
  %v85 = vmul.f32 %v21, %v63
  %v86 = vmul.f32 %v22, %v63
  %v87 = vmul.f32 %v23, %v68
  %v88 = vmul.f32 %v24, %v68
  %v89 = vmul.f32 %v25, %v73
  %v90 = vmul.f32 %v26, %v73
  %91 = vst [vmem:[%s2] sm:$0xff] %v75
  %92 = vst [vmem:[%s2 + $0x8] sm:$0xff] %v76
  %93 = vst [vmem:[%s2 + $0x10] sm:$0xff] %v77
  %94 = vst [vmem:[%s2 + $0x18] sm:$0xff] %v78
  %95 = vst [vmem:[%s2 + $0x20] sm:$0xff] %v79
  %96 = vst [vmem:[%s2 + $0x28] sm:$0xff] %v80
  %97 = vst [vmem:[%s2 + $0x30] sm:$0xff] %v81
  %98 = vst [vmem:[%s2 + $0x38] sm:$0xff] %v82
  %99 = vst [vmem:[%s2 + $0x40] sm:$0xff] %v83
  %100 = vst [vmem:[%s2 + $0x48] sm:$0xff] %v84
  %101 = vst [vmem:[%s2 + $0x50] sm:$0xff] %v85
  %102 = vst [vmem:[%s2 + $0x58] sm:$0xff] %v86
  %103 = vst [vmem:[%s2 + $0x60] sm:$0xff] %v87
  %104 = vst [vmem:[%s2 + $0x68] sm:$0xff] %v88
  %105 = vst [vmem:[%s2 + $0x70] sm:$0xff] %v89
  %106 = vst [vmem:[%s2 + $0x78] sm:$0xff] %v90
  // Predicated region
  $region10: #{channel_attention.3} parent=0 // pred_check
    _
  $region11: #{channel_attention.3} parent=0 // pred_check_branch
    %108 = sbr.rel (0) target = $region13
  $region12: #{channel_attention.3} parent=0 // pred_region
    _
  $region13: #{channel_attention.3} parent=0 // pred_fallthru
    _
  // Predicated region
  $region14: #{channel_attention.3} parent=0 // pred_check
    _
  $region15: #{channel_attention.3} parent=0 // pred_check_branch
    %110 = sbr.rel (0) target = $region17
  $region16: #{channel_attention.3} parent=0 // pred_region
    _
  $region17: #{channel_attention.3} parent=0 // pred_fallthru
    _

</llo_original>
